<compile_context>
chip_gen: v5e
topology: v5e:2x2
jax: 0.10.0
libtpu: 0.0.40
codegen_flags: <defaults>
</compile_context>

<pallas_src>
import functools

import jax
import jax.numpy as jnp
from jax.experimental import pallas as pl
from jax.experimental.pallas import tpu as pltpu

_LANES = 128


def _round_up(n: int, m: int) -> int:
    return ((n + m - 1) // m) * m


def _charbonnier_kernel(x_ref, y_ref, o_ref, acc_ref, *,
                        eps, total, tile_rows, need_mask):
    i = pl.program_id(0)

    @pl.when(i == 0)
    def _init():
        acc_ref[...] = jnp.zeros_like(acc_ref)

    diff = x_ref[...].astype(jnp.float32) - y_ref[...].astype(jnp.float32)
    val = jnp.sqrt(diff * diff + jnp.float32(eps))

    if need_mask:
        # Zero out contributions from the zero-padded tail.
        row = jax.lax.broadcasted_iota(jnp.int32, (tile_rows, _LANES), 0)
        lane = jax.lax.broadcasted_iota(jnp.int32, (tile_rows, _LANES), 1)
        gidx = i * (tile_rows * _LANES) + row * _LANES + lane
        val = jnp.where(gidx < total, val, jnp.float32(0.0))

    # Elementwise accumulation (VALU only); defer the cross-lane reduce.
    acc_ref[...] += val

    @pl.when(i == pl.num_programs(0) - 1)
    def _finalize():
        o_ref[...] = jnp.sum(acc_ref[...], axis=(0, 1), keepdims=True)


def charbonnier_loss(x: jax.Array, y: jax.Array,
                     eps: float = 1e-6, block_rows: int = 512) -> jax.Array:
    """Pallas equivalent of CharbonnierLoss.forward. Returns a scalar."""
    assert x.shape == y.shape, (x.shape, y.shape)
    total = int(x.size)

    xf = jnp.ravel(x).astype(jnp.float32)
    yf = jnp.ravel(y).astype(jnp.float32)

    rows = pl.cdiv(total, _LANES)
    tile_rows = min(block_rows, _round_up(rows, 8))
    padded_rows = _round_up(rows, tile_rows)
    padded_total = padded_rows * _LANES
    need_mask = padded_total != total
    if need_mask:
        pad = padded_total - total
        xf = jnp.pad(xf, (0, pad))
        yf = jnp.pad(yf, (0, pad))

    x2 = xf.reshape(padded_rows, _LANES)
    y2 = yf.reshape(padded_rows, _LANES)
    grid = padded_rows // tile_rows

    kernel = functools.partial(
        _charbonnier_kernel,
        eps=float(eps), total=total, tile_rows=tile_rows, need_mask=need_mask)

    out = pl.pallas_call(
        kernel,
        out_shape=jax.ShapeDtypeStruct((1, 1), jnp.float32),
        grid_spec=pltpu.PrefetchScalarGridSpec(
            num_scalar_prefetch=0,
            grid=(grid,),
            in_specs=[
                pl.BlockSpec((tile_rows, _LANES), lambda i: (i, 0)),
                pl.BlockSpec((tile_rows, _LANES), lambda i: (i, 0)),
            ],
            out_specs=pl.BlockSpec((1, 1), lambda i: (0, 0)),
            scratch_shapes=[pltpu.VMEM((tile_rows, _LANES), jnp.float32)],
        ),
        compiler_params=pltpu.CompilerParams(
            dimension_semantics=("arbitrary",),  # reduction axis
        ),
        cost_estimate=pl.CostEstimate(
            flops=4 * total,
            transcendentals=total,          # sqrt
            bytes_accessed=2 * 4 * total + 4,
        ),
    )(x2, y2)
    return out[0, 0]


def charbonnier_loss_ref(x: jax.Array, y: jax.Array,
                         eps: float = 1e-6) -> jax.Array:
    """Pure-JAX reference mirroring the torch module."""
    diff = x.astype(jnp.float32) - y.astype(jnp.float32)
    return jnp.sum(jnp.sqrt(diff * diff + jnp.float32(eps)))


if __name__ == "__main__":
    key = jax.random.PRNGKey(0)
    k1, k2, k3, k4 = jax.random.split(key, 4)

    # Small shapes consistent with the module: image-like batch (B, C, H, W).
    x = jax.random.normal(k1, (2, 4, 16, 16), dtype=jnp.float32)
    y = jax.random.normal(k2, (2, 4, 16, 16), dtype=jnp.float32)

    loss = jax.block_until_ready(charbonnier_loss(x, y))
    ref = charbonnier_loss_ref(x, y)
    assert loss.shape == (), loss.shape
    assert jnp.allclose(loss, ref, rtol=1e-4, atol=1e-3), (loss, ref)

    # Also exercise the padded / masked path (size not a multiple of 128).
    a = jax.random.normal(k3, (3, 5, 7), dtype=jnp.float32)
    b = jax.random.normal(k4, (3, 5, 7), dtype=jnp.float32)
    loss2 = jax.block_until_ready(charbonnier_loss(a, b))
    ref2 = charbonnier_loss_ref(a, b)
    assert jnp.allclose(loss2, ref2, rtol=1e-4, atol=1e-3), (loss2, ref2)

    print("KERNEL_OK")
</pallas_src>

<mosaic_0001>
module attributes {stable_mosaic.version = 11 : i64} {
  func.func @_charbonnier_kernel(%arg0: i32, %arg1: memref<16x128xf32, #tpu.memory_space<vmem>>, %arg2: memref<16x128xf32, #tpu.memory_space<vmem>>, %arg3: memref<1x1xf32, #tpu.memory_space<vmem>>, %arg4: memref<16x128xf32, #tpu.memory_space<vmem>>) attributes {dimension_semantics = [#tpu.dimension_semantics<arbitrary>], iteration_bounds = array<i64: 1>, scalar_prefetch = 0 : i64, scratch_operands = 1 : i64, tpu.core_type = #tpu.core_type<tc>, window_params = [{transform_indices = @transform_0, window_bounds = array<i64: 16, 128>}, {transform_indices = @transform_1, window_bounds = array<i64: 16, 128>}, {pipeline_mode = #tpu.pipeline_mode<synchronous>, transform_indices = @transform_2, window_bounds = array<i64: 1, 1>}]} {
    %c0_i32 = arith.constant 0 : i32
    %0 = arith.cmpi eq, %arg0, %c0_i32 : i32
    %1 = arith.extui %0 : i1 to i32
    %c0_i32_0 = arith.constant 0 : i32
    %2 = arith.cmpi ne, %1, %c0_i32_0 : i32
    scf.if %2 {
      %cst_10 = arith.constant 0.000000e+00 : f32
      %16 = vector.broadcast %cst_10 : f32 to vector<16x128xf32>
      %c0_11 = arith.constant 0 : index
      %c0_12 = arith.constant 0 : index
      %17 = vector.load %arg4[%c0_11, %c0_12] : memref<16x128xf32, #tpu.memory_space<vmem>>, vector<16x128xf32>
      tpu.vector_store %arg4[%c0_11, %c0_12], %16 {strides = array<i32>} : memref<16x128xf32, #tpu.memory_space<vmem>>, vector<16x128xf32>,
    } else {
    }
    %c0 = arith.constant 0 : index
    %c0_1 = arith.constant 0 : index
    %3 = vector.load %arg1[%c0, %c0_1] : memref<16x128xf32, #tpu.memory_space<vmem>>, vector<16x128xf32>
    %c0_2 = arith.constant 0 : index
    %c0_3 = arith.constant 0 : index
    %4 = vector.load %arg2[%c0_2, %c0_3] : memref<16x128xf32, #tpu.memory_space<vmem>>, vector<16x128xf32>
    %5 = arith.subf %3, %4 : vector<16x128xf32>
    %6 = arith.mulf %5, %5 : vector<16x128xf32>
    %cst = arith.constant 9.99999997E-7 : f32
    %7 = vector.broadcast %cst : f32 to vector<16x128xf32>
    %8 = arith.addf %6, %7 : vector<16x128xf32>
    %9 = math.sqrt %8 : vector<16x128xf32>
    %c0_4 = arith.constant 0 : index
    %c0_5 = arith.constant 0 : index
    %10 = vector.load %arg4[%c0_4, %c0_5] : memref<16x128xf32, #tpu.memory_space<vmem>>, vector<16x128xf32>
    %11 = arith.addf %10, %9 : vector<16x128xf32>
    %c0_6 = arith.constant 0 : index
    %c0_7 = arith.constant 0 : index
    %12 = vector.load %arg4[%c0_6, %c0_7] : memref<16x128xf32, #tpu.memory_space<vmem>>, vector<16x128xf32>
    tpu.vector_store %arg4[%c0_6, %c0_7], %11 {strides = array<i32>} : memref<16x128xf32, #tpu.memory_space<vmem>>, vector<16x128xf32>,
    %c0_i32_8 = arith.constant 0 : i32
    %13 = arith.cmpi eq, %arg0, %c0_i32_8 : i32
    %14 = arith.extui %13 : i1 to i32
    %c0_i32_9 = arith.constant 0 : i32
    %15 = arith.cmpi ne, %14, %c0_i32_9 : i32
    scf.if %15 {
      %c0_10 = arith.constant 0 : index
      %c0_11 = arith.constant 0 : index
      %16 = vector.load %arg4[%c0_10, %c0_11] : memref<16x128xf32, #tpu.memory_space<vmem>>, vector<16x128xf32>
      %17 = vector.shape_cast %16 : vector<16x128xf32> to vector<1x16x128xf32>
      %cst_12 = arith.constant dense<0.000000e+00> : vector<1xf32>
      %18 = vector.multi_reduction <add>, %17, %cst_12 [1, 2] : vector<1x16x128xf32> to vector<1xf32>
      %19 = vector.shape_cast %18 : vector<1xf32> to vector<1x1x1xf32>
      %20 = vector.extract %19[0, 0, 0] : f32 from vector<1x1x1xf32>
      %21 = vector.broadcast %20 : f32 to vector<1x1xf32>
      %c0_13 = arith.constant 0 : index
      %c0_14 = arith.constant 0 : index
      %22 = vector.load %arg3[%c0_13, %c0_14] : memref<1x1xf32, #tpu.memory_space<vmem>>, vector<1x1xf32>
      tpu.vector_store %arg3[%c0_13, %c0_14], %21 {strides = array<i32>} : memref<1x1xf32, #tpu.memory_space<vmem>>, vector<1x1xf32>,
    } else {
    }
    return
  }
  func.func @transform_0(%arg0: i32) -> (i32, i32) {
    %c0_i32 = arith.constant 0 : i32
    %c0_i32_0 = arith.constant 0 : i32
    return %arg0, %c0_i32 : i32, i32
  }
  func.func @transform_1(%arg0: i32) -> (i32, i32) {
    %c0_i32 = arith.constant 0 : i32
    %c0_i32_0 = arith.constant 0 : i32
    return %arg0, %c0_i32 : i32, i32
  }
  func.func @transform_2(%arg0: i32) -> (i32, i32) {
    %c0_i32 = arith.constant 0 : i32
    %c0_i32_0 = arith.constant 0 : i32
    %c0_i32_1 = arith.constant 0 : i32
    return %c0_i32, %c0_i32_0 : i32, i32
  }
}

</mosaic_0001>

<llo_original>
// kernel: tpu_custom_call.1
$region0: #{tpu_custom_call.1}
  #allocation0 [shape = 'u32[]', space=smem, size = 0x4, offset = 0x4, fixed_abs, tag = 'smem constant byte address 0x4 - core index']
  #allocation1 [shape = 'u32[72,128]{1,0:T(1,128)}', space=vmem, size = 0x9000, scoped, tag = 'internal scratch']
  #allocation2 [shape = 'f32[16,128]{1,0:T(8,128)}', space=vmem, size = 0x2000, scoped, tag = 'scratch operand']
  %s0 = inlined_call_operand.hbm [shape: f32[16,128], index: 0, kind: input, shape index: {}]
  %s1 = inlined_call_operand.hbm [shape: f32[16,128], index: 1, kind: input, shape index: {}]
  %s2 = inlined_call_operand.hbm [shape: f32[1,1], index: 2, kind: output, shape index: {}]
  %s3 = sld [smem:[#allocation0]]
  $region34: #{tpu_custom_call.1} parent=0
    _
  %s5 = ssub.s32 1, %s3
  %s6 = scalar_select 0, %s5, %s3
  $region1: #{tpu_custom_call.1} parent=0
    #allocation3 [shape = 'u8[8192]{0}', space=vmem, size = 0x2000, scoped, tag = 'input window, operand 0, single buffered']
    #allocation4 [shape = 's32[1]{0}', space=sflag, size = 0x4, scoped, tag = 'scoped memory for tpu_custom_call.1']
    #allocation5 [shape = 's32[1]{0}', space=sflag, size = 0x4, scoped, tag = 'scoped memory for tpu_custom_call.1']
    #allocation6 [shape = 'u8[8192]{0}', space=vmem, size = 0x2000, scoped, tag = 'input window, operand 1, single buffered']
    #allocation7 [shape = 's32[1]{0}', space=sflag, size = 0x4, scoped, tag = 'scoped memory for tpu_custom_call.1']
    #allocation8 [shape = 'u8[512]{0}', space=vmem, size = 0x400, scoped, tag = 'output window, operand 0, single buffered']
    %7 = vsyncpa [#allocation4], 0
    %8 = vsyncpa [#allocation7], 0
    %9 = vsyncpa [#allocation5], 0
    // Predicated region
    $region2: #{tpu_custom_call.1} parent=1 // pred_check
      _
    $region3: #{tpu_custom_call.1} parent=1 // pred_check_branch
      %11 = sbr.rel (0) target = $region5
    $region4: #{tpu_custom_call.1} parent=1 // pred_region
      %13 = vsyncadd [#allocation4], 0
      %s14 = sshll.u32 %s0, 4
      %s15 = int_to_ptr.hbm [resolvable:$true] %s14
      %s16 = sshll.u32 [#allocation3], 4
      %s17 = int_to_ptr.vmem [resolvable:$true] %s16
      %22 = dma.hbm_to_vmem [thread:$0]  %s15, 256, %s17, [#allocation4], 128, 128, 8
    $region5: #{tpu_custom_call.1} parent=1 // pred_fallthru
      _
    // Predicated region
    $region6: #{tpu_custom_call.1} parent=1 // pred_check
      _
    $region7: #{tpu_custom_call.1} parent=1 // pred_check_branch
      %24 = sbr.rel (0) target = $region9
    $region8: #{tpu_custom_call.1} parent=1 // pred_region
      %26 = vsyncadd [#allocation7], 0
      %s27 = sshll.u32 %s1, 4
      %s28 = int_to_ptr.hbm [resolvable:$true] %s27
      %s29 = sshll.u32 [#allocation6], 4
      %s30 = int_to_ptr.vmem [resolvable:$true] %s29
      %35 = dma.hbm_to_vmem [thread:$0]  %s28, 256, %s30, [#allocation7], 128, 128, 8
    $region9: #{tpu_custom_call.1} parent=1 // pred_fallthru
      _
    // Predicated region
    $region10: #{tpu_custom_call.1} parent=1 // pred_check
      _
    $region11: #{tpu_custom_call.1} parent=1 // pred_check_branch
      %37 = sbr.rel (0) target = $region13
    $region12: #{tpu_custom_call.1} parent=1 // pred_region
      %39 = dma.done [#allocation4], 256
    $region13: #{tpu_custom_call.1} parent=1 // pred_fallthru
      _
    // Predicated region
    $region14: #{tpu_custom_call.1} parent=1 // pred_check
      _
    $region15: #{tpu_custom_call.1} parent=1 // pred_check_branch
      %41 = sbr.rel (0) target = $region17
    $region16: #{tpu_custom_call.1} parent=1 // pred_region
      %43 = dma.done [#allocation7], 256
    $region17: #{tpu_custom_call.1} parent=1 // pred_fallthru
      _
    %p44 = scmp.eq.s32.totalorder 0, 0
    // Predicated region
    $region18: #{tpu_custom_call.1} parent=1 // pred_check
      %p45 = pneg %p44
    $region19: #{tpu_custom_call.1} parent=1 // pred_check_branch
      %47 = sbr.rel (%p45) target = $region21
    $region20: #{tpu_custom_call.1} parent=1 // pred_region
      %48 = vst [vmem:[#allocation2] sm:$0xff] 0.0
      %49 = vst [vmem:[#allocation2 + $0x8] sm:$0xff] 0.0
    $region21: #{tpu_custom_call.1} parent=1 // pred_fallthru
      _
    %v50 = vld [vmem:[#allocation3] sm:$0xff]
    %v51 = vld [vmem:[#allocation3 + $0x8] sm:$0xff]
    %v52 = vld [vmem:[#allocation6] sm:$0xff]
    %v53 = vld [vmem:[#allocation6 + $0x8] sm:$0xff]
    %v54 = vsub.f32 %v50, %v52
    %v55 = vsub.f32 %v51, %v53
    %v56 = vmul.f32 %v54, %v54
    %v57 = vmul.f32 %v55, %v55
    %v58 = vadd.f32 %v56, 1e-06
    %v59 = vadd.f32 %v57, 1e-06
    %v60 = vrsqrt.pop %v58
    %v61 = vmul.f32 %v60, %v58
    %v62 = vmul.f32 %v61, %v60
    %v63 = vmul.f32 0.5, %v62
    %v64 = vsub.f32 1.5, %v63
    %v65 = vmul.f32 %v60, %v64
    %v66 = vmul.f32 %v58, %v65
    %vm67 = vcmp.eq.f32.partialorder %v58, inf
    %v68 = vsel %vm67, %v58, %v66
    %vm69 = vcmp.eq.f32.partialorder %v58, 0.0
    %v70 = vand.u32 %v58, 2147483648
    %v71 = vsel %vm69, %v70, %v68
    %v72 = vrsqrt.pop %v59
    %v73 = vmul.f32 %v72, %v59
    %v74 = vmul.f32 %v73, %v72
    %v75 = vmul.f32 0.5, %v74
    %v76 = vsub.f32 1.5, %v75
    %v77 = vmul.f32 %v72, %v76
    %v78 = vmul.f32 %v59, %v77
    %vm79 = vcmp.eq.f32.partialorder %v59, inf
    %v80 = vsel %vm79, %v59, %v78
    %vm81 = vcmp.eq.f32.partialorder %v59, 0.0
    %v82 = vand.u32 %v59, 2147483648
    %v83 = vsel %vm81, %v82, %v80
    %v84 = vld [vmem:[#allocation2] sm:$0xff]
    %v85 = vld [vmem:[#allocation2 + $0x8] sm:$0xff]
    %v86 = vadd.f32 %v84, %v71
    %v87 = vadd.f32 %v85, %v83
    %88 = vst [vmem:[#allocation2] sm:$0xff] %v86
    %89 = vst [vmem:[#allocation2 + $0x8] sm:$0xff] %v87
    // Predicated region
    $region22: #{tpu_custom_call.1} parent=1 // pred_check
      %p90 = pneg %p44
    $region23: #{tpu_custom_call.1} parent=1 // pred_check_branch
      %92 = sbr.rel (%p90) target = $region25
    $region24: #{tpu_custom_call.1} parent=1 // pred_region
      %v93 = vld [vmem:[#allocation2] sm:$0xff]
      %v94 = vld [vmem:[#allocation2 + $0x8] sm:$0xff]
      %v95 = vadd.f32 %v93, %v94
      %96 = vadd.xlane.f32.xlu0 %v95
      %v97 = vpop.xlane.xlu0 %96
      %v98 = vrot.slane %v97, 4
      %v99 = vadd.f32 %v97, %v98
      %v100 = vrot.slane %v99, 2
      %v101 = vadd.f32 %v99, %v100
      %v102 = vrot.slane %v101, 1
      %v103 = vadd.f32 %v101, %v102
      %s104 = vtos %v103
      %v105 = vstv %s104
      %vm106 = vcmask 0
      %107 = vst.msk [vmem:[#allocation8] sm:$0x1] %vm106, %v105
    $region25: #{tpu_custom_call.1} parent=1 // pred_fallthru
      _
    // Predicated region
    $region26: #{tpu_custom_call.1} parent=1 // pred_check
      _
    $region27: #{tpu_custom_call.1} parent=1 // pred_check_branch
      %109 = sbr.rel (0) target = $region29
    $region28: #{tpu_custom_call.1} parent=1 // pred_region
      %111 = vsyncadd [#allocation5], 0
      %s113 = sshll.u32 [#allocation8], 4
      %s114 = int_to_ptr.vmem [resolvable:$true] %s113
      %s115 = sshll.u32 %s2, 4
      %s116 = int_to_ptr.hbm [resolvable:$true] %s115
      %118 = dma.vmem_to_hbm [thread:$0]  %s114, 16, %s116, [#allocation5]
    $region29: #{tpu_custom_call.1} parent=1 // pred_fallthru
      _
    // Predicated region
    $region30: #{tpu_custom_call.1} parent=1 // pred_check
      _
    $region31: #{tpu_custom_call.1} parent=1 // pred_check_branch
      %120 = sbr.rel (0) target = $region33
    $region32: #{tpu_custom_call.1} parent=1 // pred_region
      %122 = dma.done [#allocation5], 16
    $region33: #{tpu_custom_call.1} parent=1 // pred_fallthru
      _
    %123 = vsyncpa [#allocation4], 1
    %124 = vsyncpa [#allocation7], 1
    %125 = vsyncpa [#allocation5], 1

</llo_original>
